<compile_context>
chip_gen: v5e
topology: v5e:2x2
jax: 0.10.0
libtpu: 0.0.40
codegen_flags: <defaults>
</compile_context>

<pallas_src>
import functools

import jax
import jax.numpy as jnp
from jax.experimental import pallas as pl
from jax.experimental.pallas import tpu as pltpu


def _round_up(x, m):
    return ((x + m - 1) // m) * m


def _mlp_kernel(x_ref, w1_ref, b1_ref, w2_ref, b2_ref, o_ref):
    # hidden = relu(x @ W1 + b1)  -- f32 accumulation on the MXU, bias/ReLU on the VPU.
    h = jnp.dot(x_ref[...], w1_ref[...], preferred_element_type=jnp.float32)
    h = jnp.maximum(h + b1_ref[...], 0.0)
    # logits = hidden @ W2p + b2p -- W2/b2 are zero-padded to 128 lanes for the MXU,
    # but only the first C (= o_ref lane count) columns are stored, so the HBM
    # writeback is the narrow (TB, C) block, not a 128-lane-padded slab.
    out = jnp.dot(h, w2_ref[...], preferred_element_type=jnp.float32) + b2_ref[...]
    o_ref[...] = out[:, : o_ref.shape[-1]].astype(o_ref.dtype)


@functools.partial(jax.jit, static_argnames=("tb",))
def multiclass_forward(x, w1, b1, w2, b2, *, tb=8192):
    """x: (B, F); w1: (F, H); b1: (1, H); w2: (H, C); b2: (1, C) -> (B, C)."""
    B, F = x.shape
    H = w1.shape[1]
    C = w2.shape[1]

    # Zero-pad the class dim of the weights/bias ONLY (compute-side) up to 128 lanes
    # so the second matmul is a clean MXU op; the kernel slices back to C before the
    # HBM store, so no padded logits ever hit HBM.
    C_pad = _round_up(max(C, 1), 128)
    w2p = jnp.zeros((H, C_pad), w2.dtype).at[:, :C].set(w2)
    b2p = jnp.zeros((1, C_pad), b2.dtype).at[:, :C].set(b2)

    # Batch tile: large (default 8192) to amortize the ~0.35 us per-grid-step overhead.
    # Always a multiple of 8 (sublane constraint), never (much) larger than the batch.
    TB = _round_up(min(tb, max(B, 1)), 8)
    # If the batch spans more than one tile, balance it over >=2 grid steps so the
    # "parallel" batch axis can feed both TensorCores on v7x.
    if B > TB:
        TB = min(TB, _round_up(-(-B // 2), 8))

    # No jnp.pad of x: cdiv grid; Pallas masks the ragged last block's OOB output rows.
    grid = (pl.cdiv(B, TB),)

    # VMEM accounting: x (F=4) and out (C=3) tiles both lane-pad to 128 lanes in VMEM,
    # so double-buffered tiles cost ~ 2*(TB*128*4) + 2*(TB*128*4) = 2048*TB bytes,
    # plus tiny resident weights. TB=8192 -> ~16 MiB, well inside v7x's 64 MiB.
    vmem_needed = 4 * TB * 128 * 4 + (2 << 20)
    vmem_limit = int(min(max(vmem_needed, 32 << 20), 100 << 20))

    out = pl.pallas_call(
        _mlp_kernel,
        out_shape=jax.ShapeDtypeStruct((B, C), x.dtype),
        grid_spec=pl.GridSpec(
            grid=grid,
            in_specs=[
                # x: tiled over batch (double-buffered by the pipeline)
                pl.BlockSpec((TB, F), lambda i: (i, 0)),
                # weights / biases: constant index_map -> loaded once, VMEM-resident
                pl.BlockSpec((F, H), lambda i: (0, 0)),
                pl.BlockSpec((1, H), lambda i: (0, 0)),
                pl.BlockSpec((H, C_pad), lambda i: (0, 0)),
                pl.BlockSpec((1, C_pad), lambda i: (0, 0)),
            ],
            # Narrow (TB, C) writeback: last dim equals the full array dim, so this is
            # a legal block; masked vst on 3 lanes beats writing 128-lane-padded rows.
            out_specs=pl.BlockSpec((TB, C), lambda i: (i, 0)),
        ),
        compiler_params=pltpu.CompilerParams(
            # batch tiles are independent -> shard across TensorCores on v7x
            dimension_semantics=("parallel",),
            vmem_limit_bytes=vmem_limit,
        ),
    )(x, w1, b1, w2p, b2p)

    return out


def init_params(key, in_features, hidden, out_features, dtype=jnp.float32):
    """Deterministic init mimicking PyTorch nn.Linear default (uniform +-1/sqrt(fan_in))."""
    k1, k2, k3, k4 = jax.random.split(key, 4)
    bound1 = 1.0 / jnp.sqrt(jnp.array(in_features, dtype))
    bound2 = 1.0 / jnp.sqrt(jnp.array(hidden, dtype))
    # Stored pre-transposed: (in, out) instead of PyTorch's (out, in).
    w1 = jax.random.uniform(k1, (in_features, hidden), dtype, -bound1, bound1)
    b1 = jax.random.uniform(k2, (1, hidden), dtype, -bound1, bound1)
    w2 = jax.random.uniform(k3, (hidden, out_features), dtype, -bound2, bound2)
    b2 = jax.random.uniform(k4, (1, out_features), dtype, -bound2, bound2)
    return w1, b1, w2, b2


if __name__ == "__main__":
    # Shapes implied by the module: X_train.shape[1] = 4 features (Iris-style),
    # hidden = 8, y_train.shape[1] = 3 classes (one-hot targets).
    F, H, C = 4, 8, 3
    key = jax.random.PRNGKey(0)
    kx1, kx2, kx3, kp = jax.random.split(key, 4)
    w1, b1, w2, b2 = init_params(kp, F, H, C)

    def ref_forward(x):
        return jnp.maximum(x @ w1 + b1, 0.0) @ w2 + b2

    # Case 1: tiny batch (single grid step, TB == B == 8).
    B1 = 8
    x1 = jax.random.normal(kx1, (B1, F), dtype=jnp.float32)
    out1 = jax.block_until_ready(multiclass_forward(x1, w1, b1, w2, b2))
    assert out1.shape == (B1, C)
    assert jnp.allclose(out1, ref_forward(x1), atol=1e-5, rtol=1e-5)

    # Case 2: multi-tile grid with a ragged last block w.r.t. TB (200 = 3*64 + 8):
    # exercises the cdiv grid, pipeline, and narrow (TB, C) writeback.
    B2 = 200
    x2 = jax.random.normal(kx2, (B2, F), dtype=jnp.float32)
    out2 = jax.block_until_ready(multiclass_forward(x2, w1, b1, w2, b2, tb=64))
    assert out2.shape == (B2, C)
    assert jnp.allclose(out2, ref_forward(x2), atol=1e-5, rtol=1e-5)

    # Case 3: batch not a multiple of 8 (sublane-ragged block, OOB rows masked on store).
    B3 = 13
    x3 = jax.random.normal(kx3, (B3, F), dtype=jnp.float32)
    out3 = jax.block_until_ready(multiclass_forward(x3, w1, b1, w2, b2))
    assert out3.shape == (B3, C)
    assert jnp.allclose(out3, ref_forward(x3), atol=1e-5, rtol=1e-5)

    print("KERNEL_OK")
</pallas_src>

<mosaic_0001>
module attributes {stable_mosaic.version = 11 : i64} {
  func.func @_mlp_kernel(%arg0: i32, %arg1: memref<8x4xf32, #tpu.memory_space<vmem>>, %arg2: memref<4x8xf32, #tpu.memory_space<vmem>>, %arg3: memref<1x8xf32, #tpu.memory_space<vmem>>, %arg4: memref<8x128xf32, #tpu.memory_space<vmem>>, %arg5: memref<1x128xf32, #tpu.memory_space<vmem>>, %arg6: memref<8x3xf32, #tpu.memory_space<vmem>>) attributes {dimension_semantics = [#tpu.dimension_semantics<parallel>], iteration_bounds = array<i64: 1>, scalar_prefetch = 0 : i64, scratch_operands = 0 : i64, tpu.core_type = #tpu.core_type<tc>, window_params = [{transform_indices = @transform_0, window_bounds = array<i64: 8, 4>}, {pipeline_mode = #tpu.pipeline_mode<synchronous>, transform_indices = @transform_1, window_bounds = array<i64: 4, 8>}, {pipeline_mode = #tpu.pipeline_mode<synchronous>, transform_indices = @transform_2, window_bounds = array<i64: 1, 8>}, {pipeline_mode = #tpu.pipeline_mode<synchronous>, transform_indices = @transform_3, window_bounds = array<i64: 8, 128>}, {pipeline_mode = #tpu.pipeline_mode<synchronous>, transform_indices = @transform_4, window_bounds = array<i64: 1, 128>}, {transform_indices = @transform_5, window_bounds = array<i64: 8, 3>}]} {
    %c0 = arith.constant 0 : index
    %c0_0 = arith.constant 0 : index
    %0 = vector.load %arg1[%c0, %c0_0] : memref<8x4xf32, #tpu.memory_space<vmem>>, vector<8x4xf32>
    %c0_1 = arith.constant 0 : index
    %c0_2 = arith.constant 0 : index
    %1 = vector.load %arg2[%c0_1, %c0_2] : memref<4x8xf32, #tpu.memory_space<vmem>>, vector<4x8xf32>
    %cst = arith.constant dense<0.000000e+00> : vector<8x8xf32>
    %2 = tpu.matmul %0, %1, %cst {dimension_numbers = #tpu.dot_dimension_numbers<[1], [0], [0], [1], [0, 0, 1, 1], [], []>} : vector<8x4xf32>, vector<4x8xf32>, vector<8x8xf32> -> vector<8x8xf32>
    %c0_3 = arith.constant 0 : index
    %c0_4 = arith.constant 0 : index
    %3 = vector.load %arg3[%c0_3, %c0_4] : memref<1x8xf32, #tpu.memory_space<vmem>>, vector<1x8xf32>
    %4 = vector.broadcast %3 : vector<1x8xf32> to vector<8x8xf32>
    %5 = arith.addf %2, %4 : vector<8x8xf32>
    %cst_5 = arith.constant 0.000000e+00 : f32
    %6 = vector.broadcast %cst_5 : f32 to vector<8x8xf32>
    %7 = arith.maximumf %5, %6 : vector<8x8xf32>
    %c0_6 = arith.constant 0 : index
    %c0_7 = arith.constant 0 : index
    %8 = vector.load %arg4[%c0_6, %c0_7] : memref<8x128xf32, #tpu.memory_space<vmem>>, vector<8x128xf32>
    %cst_8 = arith.constant dense<0.000000e+00> : vector<8x128xf32>
    %9 = tpu.matmul %7, %8, %cst_8 {dimension_numbers = #tpu.dot_dimension_numbers<[1], [0], [0], [1], [0, 0, 1, 1], [], []>} : vector<8x8xf32>, vector<8x128xf32>, vector<8x128xf32> -> vector<8x128xf32>
    %c0_9 = arith.constant 0 : index
    %c0_10 = arith.constant 0 : index
    %10 = vector.load %arg5[%c0_9, %c0_10] : memref<1x128xf32, #tpu.memory_space<vmem>>, vector<1x128xf32>
    %11 = vector.broadcast %10 : vector<1x128xf32> to vector<8x128xf32>
    %12 = arith.addf %9, %11 : vector<8x128xf32>
    %13 = vector.extract_strided_slice %12 {offsets = [0, 0], sizes = [8, 3], strides = [1, 1]} : vector<8x128xf32> to vector<8x3xf32>
    %c0_11 = arith.constant 0 : index
    %c0_12 = arith.constant 0 : index
    %14 = vector.load %arg6[%c0_11, %c0_12] : memref<8x3xf32, #tpu.memory_space<vmem>>, vector<8x3xf32>
    tpu.vector_store %arg6[%c0_11, %c0_12], %13 {strides = array<i32>} : memref<8x3xf32, #tpu.memory_space<vmem>>, vector<8x3xf32>,
    return
  }
  func.func @transform_0(%arg0: i32) -> (i32, i32) {
    %c0_i32 = arith.constant 0 : i32
    %c0_i32_0 = arith.constant 0 : i32
    return %arg0, %c0_i32 : i32, i32
  }
  func.func @transform_1(%arg0: i32) -> (i32, i32) {
    %c0_i32 = arith.constant 0 : i32
    %c0_i32_0 = arith.constant 0 : i32
    %c0_i32_1 = arith.constant 0 : i32
    return %c0_i32, %c0_i32_0 : i32, i32
  }
  func.func @transform_2(%arg0: i32) -> (i32, i32) {
    %c0_i32 = arith.constant 0 : i32
    %c0_i32_0 = arith.constant 0 : i32
    %c0_i32_1 = arith.constant 0 : i32
    return %c0_i32, %c0_i32_0 : i32, i32
  }
  func.func @transform_3(%arg0: i32) -> (i32, i32) {
    %c0_i32 = arith.constant 0 : i32
    %c0_i32_0 = arith.constant 0 : i32
    %c0_i32_1 = arith.constant 0 : i32
    return %c0_i32, %c0_i32_0 : i32, i32
  }
  func.func @transform_4(%arg0: i32) -> (i32, i32) {
    %c0_i32 = arith.constant 0 : i32
    %c0_i32_0 = arith.constant 0 : i32
    %c0_i32_1 = arith.constant 0 : i32
    return %c0_i32, %c0_i32_0 : i32, i32
  }
  func.func @transform_5(%arg0: i32) -> (i32, i32) {
    %c0_i32 = arith.constant 0 : i32
    %c0_i32_0 = arith.constant 0 : i32
    return %arg0, %c0_i32 : i32, i32
  }
}

</mosaic_0001>

<llo_original>
// kernel: multiclass_forward.1
$region0: #{multiclass_forward.1}
  #allocation0 [shape = 'u32[]', space=smem, size = 0x4, offset = 0x4, fixed_abs, tag = 'smem constant byte address 0x4 - core index']
  #allocation1 [shape = 'u32[72,128]{1,0:T(1,128)}', space=vmem, size = 0x9000, scoped, tag = 'internal scratch']
  %s0 = inlined_call_operand.vmem [shape: f32[8,4], index: 0, kind: input, shape index: {}]
  %s1 = inlined_call_operand.vmem [shape: f32[4,8], index: 1, kind: input, shape index: {}]
  %s2 = inlined_call_operand.vmem [shape: f32[1,8], index: 2, kind: input, shape index: {}]
  %s3 = inlined_call_operand.vmem [shape: f32[8,128], index: 3, kind: input, shape index: {}]
  %s4 = inlined_call_operand.vmem [shape: f32[1,128], index: 4, kind: input, shape index: {}]
  %s5 = inlined_call_operand.vmem [shape: f32[8,3], index: 5, kind: output, shape index: {}]
  %s6 = sld [smem:[#allocation0]]
  $region30: #{multiclass_forward.1} parent=0
    _
  %s8 = ssub.s32 1, %s6
  %s9 = scalar_select 0, %s8, %s6
  // Predicated region
  $region2: #{multiclass_forward.1} parent=0 // pred_check
    _
  $region3: #{multiclass_forward.1} parent=0 // pred_check_branch
    %11 = sbr.rel (0) target = $region5
  $region4: #{multiclass_forward.1} parent=0 // pred_region
    _
  $region5: #{multiclass_forward.1} parent=0 // pred_fallthru
    _
  // Predicated region
  $region6: #{multiclass_forward.1} parent=0 // pred_check
    _
  $region7: #{multiclass_forward.1} parent=0 // pred_check_branch
    %13 = sbr.rel (0) target = $region9
  $region8: #{multiclass_forward.1} parent=0 // pred_region
    _
  $region9: #{multiclass_forward.1} parent=0 // pred_fallthru
    _
  // Predicated region
  $region10: #{multiclass_forward.1} parent=0 // pred_check
    _
  $region11: #{multiclass_forward.1} parent=0 // pred_check_branch
    %15 = sbr.rel (0) target = $region13
  $region12: #{multiclass_forward.1} parent=0 // pred_region
    _
  $region13: #{multiclass_forward.1} parent=0 // pred_fallthru
    _
  // Predicated region
  $region14: #{multiclass_forward.1} parent=0 // pred_check
    _
  $region15: #{multiclass_forward.1} parent=0 // pred_check_branch
    %17 = sbr.rel (0) target = $region17
  $region16: #{multiclass_forward.1} parent=0 // pred_region
    _
  $region17: #{multiclass_forward.1} parent=0 // pred_fallthru
    _
  // Predicated region
  $region18: #{multiclass_forward.1} parent=0 // pred_check
    _
  $region19: #{multiclass_forward.1} parent=0 // pred_check_branch
    %19 = sbr.rel (0) target = $region21
  $region20: #{multiclass_forward.1} parent=0 // pred_region
    _
  $region21: #{multiclass_forward.1} parent=0 // pred_fallthru
    _
  %v20 = vld [vmem:[%s0] sm:$0xff]
  %v21 = vld [vmem:[%s1] sm:$0xf]
  %v22 = vld [vmem:[%s2] sm:$0x1]
  %v24 = vperm.slane %v22, 0
  %vm26 = vcmask 31744
  %v28 = vsel %vm26, %v20, 0
  %vm30 = vcmask 1043456
  %v32 = vsel %vm30, %v21, 0
  %34 = vmatpush.msra.mxu0 0.0
  %35 = vmatpush.msra.mxu0 0.0
  %36 = vmatpush.msra.mxu0 0.0
  %37 = vmatpush.msra.mxu0 0.0
  %38 = vmatpush.msra.mxu0 0.0
  %39 = vmatpush.msra.mxu0 0.0
  %40 = vmatpush.msra.mxu0 0.0
  %41 = vmatpush.msra.mxu0 0.0
  %42 = vmatpush.msra.mxu0 0.0
  %43 = vmatpush.msra.mxu0 0.0
  %44 = vmatpush.msra.mxu0 0.0
  %45 = vmatpush.msra.mxu0 0.0
  %46 = vmatpush.msra.mxu0 0.0
  %47 = vmatpush.msra.mxu0 0.0
  %48 = vmatpush.msra.mxu0 0.0
  %49 = vmatpush.msra.mxu0 %v32
  %50 = vmatmul.f32.gmra.mxu0 %v28
  %v51 = vpop.f32.mrf.mxu0
  %v52 = vadd.f32 %v24, %v51
  %53 = vdwg.mxu0
  %v54 = vmax.f32 %v52, 0.0
  %v55 = vld [vmem:[%s3] sm:$0xff]
  %v56 = vld [vmem:[%s4] sm:$0x1]
  %v58 = vperm.slane %v56, 0
  %vm60 = vcmask 64512
  %v62 = vsel %vm60, %v54, 0
  %64 = vmatpush.msra.mxu0 0.0
  %65 = vmatpush.msra.mxu0 0.0
  %66 = vmatpush.msra.mxu0 0.0
  %67 = vmatpush.msra.mxu0 0.0
  %68 = vmatpush.msra.mxu0 0.0
  %69 = vmatpush.msra.mxu0 0.0
  %70 = vmatpush.msra.mxu0 0.0
  %71 = vmatpush.msra.mxu0 0.0
  %72 = vmatpush.msra.mxu0 0.0
  %73 = vmatpush.msra.mxu0 0.0
  %74 = vmatpush.msra.mxu0 0.0
  %75 = vmatpush.msra.mxu0 0.0
  %76 = vmatpush.msra.mxu0 0.0
  %77 = vmatpush.msra.mxu0 0.0
  %78 = vmatpush.msra.mxu0 0.0
  %79 = vmatpush.msra.mxu0 %v55
  %80 = vmatmul.f32.gmra.mxu0 %v62
  %v81 = vpop.f32.mrf.mxu0
  %v82 = vadd.f32 %v58, %v81
  %83 = vdwg.mxu0
  %vm84 = vcmask 23552
  %85 = vst.msk [vmem:[%s5] sm:$0xff] %vm84, %v82
  // Predicated region
  $region22: #{multiclass_forward.1} parent=0 // pred_check
    _
  $region23: #{multiclass_forward.1} parent=0 // pred_check_branch
    %87 = sbr.rel (0) target = $region25
  $region24: #{multiclass_forward.1} parent=0 // pred_region
    _
  $region25: #{multiclass_forward.1} parent=0 // pred_fallthru
    _
  // Predicated region
  $region26: #{multiclass_forward.1} parent=0 // pred_check
    _
  $region27: #{multiclass_forward.1} parent=0 // pred_check_branch
    %89 = sbr.rel (0) target = $region29
  $region28: #{multiclass_forward.1} parent=0 // pred_region
    _
  $region29: #{multiclass_forward.1} parent=0 // pred_fallthru
    _

</llo_original>
